<compile_context>
chip_gen: v7x
topology: tpu7x:2x2x1
jax: 0.10.0
libtpu: 0.0.40
codegen_flags: <defaults>
</compile_context>

<pallas_src>
import math
from functools import partial

import jax
import jax.numpy as jnp
from jax.experimental import pallas as pl
from jax.experimental.pallas import tpu as pltpu

_HIGHEST = jax.lax.Precision.HIGHEST
_VMEM_LIMIT = 48 * 1024 * 1024  # <= v7x 64 MiB/TC; plenty for v5e/v6e too


def _round_up(x, m):
    return ((x + m - 1) // m) * m


def _sublane(dtype):
    # dtype-aware sublane granularity: 8 rows (f32), 16 (bf16), 32 (int8/fp8)
    return 8 * (4 // jnp.dtype(dtype).itemsize)


# ---------------------------------------------------------------------------
# Tiled matmul kernels (qkv projection and output projection)
# ---------------------------------------------------------------------------

def _matmul_kernel_f32out(a_ref, b_ref, o_ref):
    # f32 output: accumulate directly into o_ref (no scratch, no epilogue copy)
    prod = jnp.dot(a_ref[...], b_ref[...], preferred_element_type=jnp.float32)

    @pl.when(pl.program_id(2) == 0)
    def _():
        o_ref[...] = prod

    @pl.when(pl.program_id(2) > 0)
    def _():
        o_ref[...] += prod


def _matmul_kernel_scratch(a_ref, b_ref, o_ref, acc_ref):
    @pl.when(pl.program_id(2) == 0)
    def _():
        acc_ref[...] = jnp.zeros_like(acc_ref)

    acc_ref[...] += jnp.dot(a_ref[...], b_ref[...],
                            preferred_element_type=jnp.float32)

    @pl.when(pl.program_id(2) == pl.num_programs(2) - 1)
    def _():
        o_ref[...] = acc_ref[...].astype(o_ref.dtype)


def matmul_pallas(a, b, *, out_dtype=None, tm=512, tn=512, tk=1024):
    """a: (M, K) @ b: (K, N) -> (M, N). bf16 MXU operands, f32 accumulation."""
    M, K = a.shape
    K2, N = b.shape
    assert K == K2
    out_dtype = out_dtype if out_dtype is not None else a.dtype

    # bf16 operands: native MXU rate + half the HBM/VMEM traffic.
    a = a.astype(jnp.bfloat16)
    b = b.astype(jnp.bfloat16)

    sub = _sublane(a.dtype)
    tm = min(tm, _round_up(M, sub))
    tn = min(tn, _round_up(N, 128))   # lane-dense output tiles
    tk = min(tk, _round_up(K, 128))
    Mp, Kp, Np = _round_up(M, tm), _round_up(K, tk), _round_up(N, tn)

    if (Mp, Kp) != (M, K):
        a = jnp.pad(a, ((0, Mp - M), (0, Kp - K)))
    if (Kp, Np) != (K, N):
        b = jnp.pad(b, ((0, Kp - K), (0, Np - N)))

    grid = (Mp // tm, Np // tn, Kp // tk)
    in_item = 2  # bf16
    out_item = jnp.dtype(out_dtype).itemsize
    cost = pl.CostEstimate(
        flops=2 * Mp * Np * Kp,
        transcendentals=0,
        bytes_accessed=(Mp * Kp * (Np // tn) + Kp * Np * (Mp // tm)) * in_item
                       + Mp * Np * out_item)

    acc_in_out = jnp.dtype(out_dtype) == jnp.float32
    kernel = _matmul_kernel_f32out if acc_in_out else _matmul_kernel_scratch
    scratch = [] if acc_in_out else [pltpu.VMEM((tm, tn), jnp.float32)]

    out = pl.pallas_call(
        kernel,
        out_shape=jax.ShapeDtypeStruct((Mp, Np), out_dtype),
        grid_spec=pltpu.PrefetchScalarGridSpec(
            num_scalar_prefetch=0,
            grid=grid,
            in_specs=[
                pl.BlockSpec((tm, tk), lambda i, j, k: (i, k)),
                pl.BlockSpec((tk, tn), lambda i, j, k: (k, j)),
            ],
            out_specs=pl.BlockSpec((tm, tn), lambda i, j, k: (i, j)),
            scratch_shapes=scratch,
        ),
        compiler_params=pltpu.CompilerParams(
            dimension_semantics=("parallel", "parallel", "arbitrary"),
            vmem_limit_bytes=_VMEM_LIMIT,
        ),
        cost_estimate=cost,
    )(a, b)

    if (Mp, Np) != (M, N):
        out = out[:M, :N]
    return out


# ---------------------------------------------------------------------------
# Flash-attention (non-causal, no dropout) over (batch*head, T, head_dim)
# ---------------------------------------------------------------------------

def _flash_kernel(scale, t_real, tkv, needs_mask,
                  q_ref, k_ref, v_ref, o_ref, m_sc, l_sc, acc_sc):
    ki = pl.program_id(2)
    last = pl.num_programs(2) - 1

    @pl.when(ki == 0)
    def _():
        m_sc[...] = jnp.full_like(m_sc, -1e30)
        l_sc[...] = jnp.zeros_like(l_sc)
        acc_sc[...] = jnp.zeros_like(acc_sc)

    # softmax scale folded into the q operand (tq x D mults, not tq x tkv);
    # bf16 operands -> native MXU, f32 accumulation.
    s_raw = jax.lax.dot_general(q_ref[...] * scale, k_ref[...],
                                (((1,), (1,)), ((), ())),
                                preferred_element_type=jnp.float32)  # (tq,tkv)

    def update(s):
        m_prev = m_sc[...]
        m_new = jnp.maximum(m_prev, s.max(axis=-1, keepdims=True))
        alpha = jnp.exp(m_prev - m_new)
        p = jnp.exp(s - m_new)                       # f32 softmax math
        l_sc[...] = alpha * l_sc[...] + p.sum(axis=-1, keepdims=True)
        acc_sc[...] = alpha * acc_sc[...] + jnp.dot(
            p.astype(v_ref.dtype), v_ref[...],
            preferred_element_type=jnp.float32)
        m_sc[...] = m_new

    if needs_mask:
        # zero-padded key positions only exist in the last kv tile: only that
        # grid step pays the iota/compare/select cost.
        @pl.when(ki != last)
        def _():
            update(s_raw)

        @pl.when(ki == last)
        def _():
            kpos = ki * tkv + jax.lax.broadcasted_iota(jnp.int32, s_raw.shape, 1)
            update(jnp.where(kpos < t_real, s_raw, -1e30))
    else:
        update(s_raw)

    @pl.when(ki == last)
    def _():
        inv_l = pl.reciprocal(l_sc[...], approx=True)   # EUP slot
        o_ref[...] = (acc_sc[...] * inv_l).astype(o_ref.dtype)


def flash_attention_pallas(q, k, v, *, tq=256, tkv=256):
    """q, k, v: (BH, T, D). Returns softmax(q k^T / sqrt(D)) v, non-causal."""
    BH, T, D = q.shape
    scale = 1.0 / math.sqrt(D)

    q = q.astype(jnp.bfloat16)
    k = k.astype(jnp.bfloat16)
    v = v.astype(jnp.bfloat16)
    out_dtype = jnp.bfloat16

    sub = _sublane(q.dtype)
    tq = min(tq, _round_up(T, sub))
    tkv = min(tkv, _round_up(T, sub))
    Tp = _round_up(_round_up(T, tq), tkv)
    needs_mask = Tp != T
    if needs_mask:
        pad = ((0, 0), (0, Tp - T), (0, 0))
        q, k, v = jnp.pad(q, pad), jnp.pad(k, pad), jnp.pad(v, pad)

    n_q = Tp // tq
    grid = (BH, n_q, Tp // tkv)
    itemsize = 2  # bf16
    cost = pl.CostEstimate(
        flops=4 * BH * Tp * Tp * D,
        transcendentals=BH * Tp * Tp,
        # q once + k/v re-read once per q tile + output once
        bytes_accessed=BH * Tp * D * itemsize * (2 + 2 * n_q))

    kernel = partial(_flash_kernel, scale, T, tkv, needs_mask)

    out = pl.pallas_call(
        kernel,
        out_shape=jax.ShapeDtypeStruct((BH, Tp, D), out_dtype),
        grid_spec=pltpu.PrefetchScalarGridSpec(
            num_scalar_prefetch=0,
            grid=grid,
            in_specs=[
                pl.BlockSpec((pl.Squeezed(), tq, D), lambda b, qi, ki: (b, qi, 0)),
                pl.BlockSpec((pl.Squeezed(), tkv, D), lambda b, qi, ki: (b, ki, 0)),
                pl.BlockSpec((pl.Squeezed(), tkv, D), lambda b, qi, ki: (b, ki, 0)),
            ],
            out_specs=pl.BlockSpec((pl.Squeezed(), tq, D),
                                   lambda b, qi, ki: (b, qi, 0)),
            scratch_shapes=[
                pltpu.VMEM((tq, 1), jnp.float32),   # running max
                pltpu.VMEM((tq, 1), jnp.float32),   # running denom
                pltpu.VMEM((tq, D), jnp.float32),   # output accumulator
            ],
        ),
        compiler_params=pltpu.CompilerParams(
            dimension_semantics=("parallel", "parallel", "arbitrary"),
            vmem_limit_bytes=_VMEM_LIMIT,
        ),
        cost_estimate=cost,
    )(q, k, v)

    if needs_mask:
        out = out[:, :T, :]
    return out


# ---------------------------------------------------------------------------
# Full Attention forward (Pallas) and pure-JAX references
# ---------------------------------------------------------------------------

def attention_pallas(x, w_attn, w_proj, n_head):
    """x: (B, T, C); w_attn: (C, 3C); w_proj: (C, C) (bias-free Linears)."""
    B, T, C = x.shape
    hs = C // n_head

    x2d = x.reshape(B * T, C)
    # bf16 intermediates between kernels -> half the inter-kernel HBM traffic.
    qkv = matmul_pallas(x2d, w_attn, out_dtype=jnp.bfloat16).reshape(B, T, 3 * C)
    q, k, v = jnp.split(qkv, 3, axis=-1)

    # TODO(synk): fold the head split/merge into the flash BlockSpec index_map
    # (lane-offset (1, tq, hs) blocks over the (B, T, 3C) qkv buffer) once
    # head_size is a multiple of 128; with hs < 128 (as in this test config)
    # such lane-sliced blocks violate the (8,128) tiling rule, so the split
    # stays as an XLA-side (bf16) transpose.
    def to_heads(t):
        return (t.reshape(B, T, n_head, hs)
                 .transpose(0, 2, 1, 3)
                 .reshape(B * n_head, T, hs))

    yh = flash_attention_pallas(to_heads(q), to_heads(k), to_heads(v))
    y = (yh.reshape(B, n_head, T, hs)
           .transpose(0, 2, 1, 3)
           .reshape(B * T, C))
    out = matmul_pallas(y, w_proj, out_dtype=x.dtype)
    return out.reshape(B, T, C)


def attention_ref_bf16(x, w_attn, w_proj, n_head):
    """Pure-JAX reference with the same bf16-operand / f32-accumulate policy."""
    B, T, C = x.shape
    hs = C // n_head
    scale = 1.0 / math.sqrt(hs)
    xb = x.astype(jnp.bfloat16)
    wa = w_attn.astype(jnp.bfloat16)
    wp = w_proj.astype(jnp.bfloat16)
    qkv = jnp.dot(xb, wa, preferred_element_type=jnp.float32).astype(jnp.bfloat16)
    q, k, v = jnp.split(qkv, 3, axis=-1)
    q = q.reshape(B, T, n_head, hs).transpose(0, 2, 1, 3)
    k = k.reshape(B, T, n_head, hs).transpose(0, 2, 1, 3)
    v = v.reshape(B, T, n_head, hs).transpose(0, 2, 1, 3)
    s = jnp.einsum("bhqd,bhkd->bhqk", q * scale, k,
                   preferred_element_type=jnp.float32)
    p = jax.nn.softmax(s, axis=-1)
    y = jnp.einsum("bhqk,bhkd->bhqd", p.astype(jnp.bfloat16), v,
                   preferred_element_type=jnp.float32).astype(jnp.bfloat16)
    y = y.transpose(0, 2, 1, 3).reshape(B, T, C)
    return jnp.dot(y, wp, preferred_element_type=jnp.float32).astype(x.dtype)


def attention_ref_f32(x, w_attn, w_proj, n_head):
    """Full-f32 reference (module semantics) for a loose sanity bound."""
    B, T, C = x.shape
    hs = C // n_head
    qkv = jnp.dot(x, w_attn, precision=_HIGHEST)
    q, k, v = jnp.split(qkv, 3, axis=-1)
    q = q.reshape(B, T, n_head, hs).transpose(0, 2, 1, 3)
    k = k.reshape(B, T, n_head, hs).transpose(0, 2, 1, 3)
    v = v.reshape(B, T, n_head, hs).transpose(0, 2, 1, 3)
    s = jnp.einsum("bhqd,bhkd->bhqk", q, k, precision=_HIGHEST) / math.sqrt(hs)
    p = jax.nn.softmax(s, axis=-1)
    y = jnp.einsum("bhqk,bhkd->bhqd", p, v, precision=_HIGHEST)
    y = y.transpose(0, 2, 1, 3).reshape(B, T, C)
    return jnp.dot(y, w_proj, precision=_HIGHEST)


if __name__ == "__main__":
    key = jax.random.PRNGKey(0)
    kx, ka, kp = jax.random.split(key, 3)

    # Small shapes consistent with the module: batch=2, seq=8, hidden=32, 4 heads.
    B, T, C, n_head = 2, 8, 32, 4
    x = jax.random.normal(kx, (B, T, C), dtype=jnp.float32)
    w_attn = jax.random.normal(ka, (C, 3 * C), dtype=jnp.float32) / math.sqrt(C)
    w_proj = jax.random.normal(kp, (C, C), dtype=jnp.float32) / math.sqrt(C)

    out = attention_pallas(x, w_attn, w_proj, n_head)
    out = jax.block_until_ready(out)
    assert out.shape == x.shape and out.dtype == x.dtype

    # Primary check: same bf16/f32 numeric policy -> tight tolerance.
    ref = attention_ref_bf16(x, w_attn, w_proj, n_head)
    max_err = float(jnp.max(jnp.abs(out - ref)))
    assert jnp.allclose(out, ref, atol=2e-2, rtol=2e-2), max_err

    # Sanity check against the full-f32 module semantics (looser bound since
    # the kernel intentionally uses bf16 MXU operands).
    ref32 = attention_ref_f32(x, w_attn, w_proj, n_head)
    max_err_f32 = float(jnp.max(jnp.abs(out - ref32)))
    assert max_err_f32 < 0.25, max_err_f32

    print("KERNEL_OK")
</pallas_src>

<mosaic_0001>
module attributes {stable_mosaic.version = 11 : i64} {
  func.func @_matmul_kernel_scratch(%arg0: i32, %arg1: i32, %arg2: i32, %arg3: memref<16x128xbf16, #tpu.memory_space<vmem>>, %arg4: memref<128x128xbf16, #tpu.memory_space<vmem>>, %arg5: memref<16x128xbf16, #tpu.memory_space<vmem>>, %arg6: memref<16x128xf32, #tpu.memory_space<vmem>>) attributes {dimension_semantics = [#tpu.dimension_semantics<parallel>, #tpu.dimension_semantics<parallel>, #tpu.dimension_semantics<arbitrary>], iteration_bounds = array<i64: 1, 1, 1>, scalar_prefetch = 0 : i64, scratch_operands = 1 : i64, tpu.core_type = #tpu.core_type<tc>, window_params = [{transform_indices = @transform_0, window_bounds = array<i64: 16, 128>}, {transform_indices = @transform_1, window_bounds = array<i64: 128, 128>}, {transform_indices = @transform_2, window_bounds = array<i64: 16, 128>}]} {
    %c0_i32 = arith.constant 0 : i32
    %0 = arith.cmpi eq, %arg2, %c0_i32 : i32
    %1 = arith.extui %0 : i1 to i32
    %c0_i32_0 = arith.constant 0 : i32
    %2 = arith.cmpi ne, %1, %c0_i32_0 : i32
    scf.if %2 {
      %cst_10 = arith.constant 0.000000e+00 : f32
      %12 = vector.broadcast %cst_10 : f32 to vector<16x128xf32>
      %c0_11 = arith.constant 0 : index
      %c0_12 = arith.constant 0 : index
      %13 = vector.load %arg6[%c0_11, %c0_12] : memref<16x128xf32, #tpu.memory_space<vmem>>, vector<16x128xf32>
      tpu.vector_store %arg6[%c0_11, %c0_12], %12 {strides = array<i32>} : memref<16x128xf32, #tpu.memory_space<vmem>>, vector<16x128xf32>,
    } else {
    }
    %c0 = arith.constant 0 : index
    %c0_1 = arith.constant 0 : index
    %3 = vector.load %arg6[%c0, %c0_1] : memref<16x128xf32, #tpu.memory_space<vmem>>, vector<16x128xf32>
    %c0_2 = arith.constant 0 : index
    %c0_3 = arith.constant 0 : index
    %4 = vector.load %arg3[%c0_2, %c0_3] : memref<16x128xbf16, #tpu.memory_space<vmem>>, vector<16x128xbf16>
    %c0_4 = arith.constant 0 : index
    %c0_5 = arith.constant 0 : index
    %5 = vector.load %arg4[%c0_4, %c0_5] : memref<128x128xbf16, #tpu.memory_space<vmem>>, vector<128x128xbf16>
    %cst = arith.constant dense<0.000000e+00> : vector<16x128xf32>
    %6 = tpu.matmul %4, %5, %cst {dimension_numbers = #tpu.dot_dimension_numbers<[1], [0], [0], [1], [0, 0, 1, 1], [], []>} : vector<16x128xbf16>, vector<128x128xbf16>, vector<16x128xf32> -> vector<16x128xf32>
    %7 = arith.addf %3, %6 : vector<16x128xf32>
    %c0_6 = arith.constant 0 : index
    %c0_7 = arith.constant 0 : index
    %8 = vector.load %arg6[%c0_6, %c0_7] : memref<16x128xf32, #tpu.memory_space<vmem>>, vector<16x128xf32>
    tpu.vector_store %arg6[%c0_6, %c0_7], %7 {strides = array<i32>} : memref<16x128xf32, #tpu.memory_space<vmem>>, vector<16x128xf32>,
    %c0_i32_8 = arith.constant 0 : i32
    %9 = arith.cmpi eq, %arg2, %c0_i32_8 : i32
    %10 = arith.extui %9 : i1 to i32
    %c0_i32_9 = arith.constant 0 : i32
    %11 = arith.cmpi ne, %10, %c0_i32_9 : i32
    scf.if %11 {
      %c0_10 = arith.constant 0 : index
      %c0_11 = arith.constant 0 : index
      %12 = vector.load %arg6[%c0_10, %c0_11] : memref<16x128xf32, #tpu.memory_space<vmem>>, vector<16x128xf32>
      %13 = arith.truncf %12 : vector<16x128xf32> to vector<16x128xbf16>
      %c0_12 = arith.constant 0 : index
      %c0_13 = arith.constant 0 : index
      %14 = vector.load %arg5[%c0_12, %c0_13] : memref<16x128xbf16, #tpu.memory_space<vmem>>, vector<16x128xbf16>
      tpu.vector_store %arg5[%c0_12, %c0_13], %13 {strides = array<i32>} : memref<16x128xbf16, #tpu.memory_space<vmem>>, vector<16x128xbf16>,
    } else {
    }
    return
  }
  func.func @transform_0(%arg0: i32, %arg1: i32, %arg2: i32) -> (i32, i32) {
    %c0_i32 = arith.constant 0 : i32
    return %arg0, %arg2 : i32, i32
  }
  func.func @transform_1(%arg0: i32, %arg1: i32, %arg2: i32) -> (i32, i32) {
    %c0_i32 = arith.constant 0 : i32
    return %arg2, %arg1 : i32, i32
  }
  func.func @transform_2(%arg0: i32, %arg1: i32, %arg2: i32) -> (i32, i32) {
    %c0_i32 = arith.constant 0 : i32
    return %arg0, %arg1 : i32, i32
  }
}

</mosaic_0001>

<llo_original>
// kernel: tpu_custom_call.1
$region0: #{tpu_custom_call.1}
  #allocation0 [shape = 'u32[]', space=smem, size = 0x4, offset = 0x4, fixed_abs, tag = 'smem constant byte address 0x4 - core index']
  #allocation1 [shape = 'u32[144,128]{1,0:T(1,128)}', space=vmem, size = 0x12000, scoped, tag = 'internal scratch']
  #allocation2 [shape = 'f32[16,128]{1,0:T(8,128)}', space=vmem, size = 0x2000, scoped, tag = 'scratch operand']
  %s0 = inlined_call_operand.hbm [shape: bf16[16,128], index: 0, kind: input, shape index: {}]
  %s1 = inlined_call_operand.hbm [shape: bf16[128,128], index: 1, kind: input, shape index: {}]
  %s2 = inlined_call_operand.hbm [shape: bf16[16,128], index: 2, kind: output, shape index: {}]
  %s3 = sld [smem:[#allocation0]]
  $region34: #{tpu_custom_call.1} parent=0
    _
  %s5 = ssub.s32 1, %s3
  %s6 = scalar_select 0, %s5, %s3
  $region1: #{tpu_custom_call.1} parent=0
    #allocation3 [shape = 'u8[4096]{0}', space=vmem, size = 0x1000, scoped, tag = 'input window, operand 0, single buffered']
    #allocation4 [shape = 's32[1]{0}', space=sflag, size = 0x4, scoped, tag = 'scoped memory for tpu_custom_call.1']
    #allocation5 [shape = 's32[1]{0}', space=sflag, size = 0x4, scoped, tag = 'scoped memory for tpu_custom_call.1']
    #allocation6 [shape = 'u8[32768]{0}', space=vmem, size = 0x8000, scoped, tag = 'input window, operand 1, single buffered']
    #allocation7 [shape = 's32[1]{0}', space=sflag, size = 0x4, scoped, tag = 'scoped memory for tpu_custom_call.1']
    #allocation8 [shape = 'u8[4096]{0}', space=vmem, size = 0x1000, scoped, tag = 'output window, operand 0, single buffered']
    %7 = vsyncpa [#allocation4], 0
    %8 = vsyncpa [#allocation7], 0
    %9 = vsyncpa [#allocation5], 0
    // Predicated region
    $region2: #{tpu_custom_call.1} parent=1 // pred_check
      _
    $region3: #{tpu_custom_call.1} parent=1 // pred_check_branch
      %11 = sbr.rel (0) target = $region5
    $region4: #{tpu_custom_call.1} parent=1 // pred_region
      %s13 = ssub.s32 128, 128
      %14 = vsyncadd [#allocation4], %s13
      %s15 = sshll.u32 [#allocation3], 4
      %s16 = int_to_ptr.vmem [resolvable:$true] %s15
      %21 = dma.hbm_to_vmem [thread:$0]  %s0, 128, %s16, [#allocation4], 64, 64, 4
    $region5: #{tpu_custom_call.1} parent=1 // pred_fallthru
      _
    // Predicated region
    $region6: #{tpu_custom_call.1} parent=1 // pred_check
      _
    $region7: #{tpu_custom_call.1} parent=1 // pred_check_branch
      %23 = sbr.rel (0) target = $region9
    $region8: #{tpu_custom_call.1} parent=1 // pred_region
      %s25 = ssub.s32 1024, 1024
      %26 = vsyncadd [#allocation7], %s25
      %s27 = sshll.u32 [#allocation6], 4
      %s28 = int_to_ptr.vmem [resolvable:$true] %s27
      %33 = dma.hbm_to_vmem [thread:$0]  %s1, 1024, %s28, [#allocation7], 64, 64, 4
    $region9: #{tpu_custom_call.1} parent=1 // pred_fallthru
      _
    // Predicated region
    $region10: #{tpu_custom_call.1} parent=1 // pred_check
      _
    $region11: #{tpu_custom_call.1} parent=1 // pred_check_branch
      %35 = sbr.rel (0) target = $region13
    $region12: #{tpu_custom_call.1} parent=1 // pred_region
      %36 = dma.done [#allocation4], 128
    $region13: #{tpu_custom_call.1} parent=1 // pred_fallthru
      _
    // Predicated region
    $region14: #{tpu_custom_call.1} parent=1 // pred_check
      _
    $region15: #{tpu_custom_call.1} parent=1 // pred_check_branch
      %38 = sbr.rel (0) target = $region17
    $region16: #{tpu_custom_call.1} parent=1 // pred_region
      %39 = dma.done [#allocation7], 1024
    $region17: #{tpu_custom_call.1} parent=1 // pred_fallthru
      _
    %p41 = scmp.eq.s32.totalorder 0, 0
    // Predicated region
    $region18: #{tpu_custom_call.1} parent=1 // pred_check
      %p42 = pneg %p41
    $region19: #{tpu_custom_call.1} parent=1 // pred_check_branch
      %44 = sbr.rel (%p42) target = $region21
    $region20: #{tpu_custom_call.1} parent=1 // pred_region
      %45 = vst [vmem:[#allocation2] sm:$0xff] 0.0
      %46 = vst [vmem:[#allocation2 + $0x8] sm:$0xff] 0.0
    $region21: #{tpu_custom_call.1} parent=1 // pred_fallthru
      _
    %v47 = vld [vmem:[#allocation2] sm:$0xff]
    %v48 = vld [vmem:[#allocation2 + $0x8] sm:$0xff]
    %v49 = vld [vmem:[#allocation3] sm:$0xf]
    %v50 = vld [vmem:[#allocation3 + $0x4] sm:$0xf]
    %v51 = vld [vmem:[#allocation6] sm:$0xf]
    %v52 = vld [vmem:[#allocation6 + $0x4] sm:$0xf]
    %v53 = vld [vmem:[#allocation6 + $0x8] sm:$0xf]
    %v54 = vld [vmem:[#allocation6 + $0xc] sm:$0xf]
    %v55 = vld [vmem:[#allocation6 + $0x10] sm:$0xf]
    %v56 = vld [vmem:[#allocation6 + $0x14] sm:$0xf]
    %v57 = vld [vmem:[#allocation6 + $0x18] sm:$0xf]
    %v58 = vld [vmem:[#allocation6 + $0x1c] sm:$0xf]
    %v59 = vld [vmem:[#allocation6 + $0x20] sm:$0xf]
    %v60 = vld [vmem:[#allocation6 + $0x24] sm:$0xf]
    %v61 = vld [vmem:[#allocation6 + $0x28] sm:$0xf]
    %v62 = vld [vmem:[#allocation6 + $0x2c] sm:$0xf]
    %v63 = vld [vmem:[#allocation6 + $0x30] sm:$0xf]
    %v64 = vld [vmem:[#allocation6 + $0x34] sm:$0xf]
    %v65 = vld [vmem:[#allocation6 + $0x38] sm:$0xf]
    %v66 = vld [vmem:[#allocation6 + $0x3c] sm:$0xf]
    %v69 = vunpack.c.l.b16 %v49
    %v70 = vunpack.c.l.b16 %v50
    %v71 = vpack.c.b16 %v70, %v69
    %v89 = vunpack.c.l.b16 %v51
    %v90 = vunpack.c.l.b16 %v52
    %v91 = vunpack.c.l.b16 %v53
    %v92 = vunpack.c.l.b16 %v54
    %v93 = vunpack.c.l.b16 %v55
    %v94 = vunpack.c.l.b16 %v56
    %v95 = vunpack.c.l.b16 %v57
    %v96 = vunpack.c.l.b16 %v58
    %v97 = vunpack.c.l.b16 %v59
    %v98 = vunpack.c.l.b16 %v60
    %v99 = vunpack.c.l.b16 %v61
    %v100 = vunpack.c.l.b16 %v62
    %v101 = vunpack.c.l.b16 %v63
    %v102 = vunpack.c.l.b16 %v64
    %v103 = vunpack.c.l.b16 %v65
    %v104 = vunpack.c.l.b16 %v66
    %v105 = vpack.c.b16 %v90, %v89
    %v106 = vpack.c.b16 %v92, %v91
    %v107 = vpack.c.b16 %v94, %v93
    %v108 = vpack.c.b16 %v96, %v95
    %v109 = vpack.c.b16 %v98, %v97
    %v110 = vpack.c.b16 %v100, %v99
    %v111 = vpack.c.b16 %v102, %v101
    %v112 = vpack.c.b16 %v104, %v103
    %121 = vmatprep.subr.bf16.mxu0 0
    %122 = vmatpush1.bf16.msra.mxu0 %v105
    %123 = vmatprep.subr.bf16.mxu0 0
    %124 = vmatpush1.bf16.msra.mxu0 %v106
    %125 = vmatprep.subr.bf16.mxu0 0
    %126 = vmatpush1.bf16.msra.mxu0 %v107
    %127 = vmatprep.subr.bf16.mxu0 0
    %128 = vmatpush1.bf16.msra.mxu0 %v108
    %129 = vmatprep.subr.bf16.mxu0 0
    %130 = vmatpush1.bf16.msra.mxu0 %v109
    %131 = vmatprep.subr.bf16.mxu0 0
    %132 = vmatpush1.bf16.msra.mxu0 %v110
    %133 = vmatprep.subr.bf16.mxu0 0
    %134 = vmatpush1.bf16.msra.mxu0 %v111
    %135 = vmatprep.subr.bf16.mxu0 0
    %136 = vmatpush1.bf16.msra.mxu0 %v112
    %137 = vmatprep.subr.bf16.mxu0 0
    %138 = vmatpush1.bf16.msra.mxu0 0
    %139 = vmatprep.subr.bf16.mxu0 0
    %140 = vmatpush1.bf16.msra.mxu0 0
    %141 = vmatprep.subr.bf16.mxu0 0
    %142 = vmatpush1.bf16.msra.mxu0 0
    %143 = vmatprep.subr.bf16.mxu0 0
    %144 = vmatpush1.bf16.msra.mxu0 0
    %145 = vmatprep.subr.bf16.mxu0 0
    %146 = vmatpush1.bf16.msra.mxu0 0
    %147 = vmatprep.subr.bf16.mxu0 0
    %148 = vmatpush1.bf16.msra.mxu0 0
    %149 = vmatprep.subr.bf16.mxu0 0
    %150 = vmatpush1.bf16.msra.mxu0 0
    %151 = vmatprep.subr.bf16.mxu0 0
    %152 = vmatpush1.bf16.msra.mxu0 0
    %153 = vmatprep.mubr.bf16.mxu0 0
    %154 = vmatmul.mubr.bf16.gmra.mrb[0].mxu0 %v71
    %v155 = vpop.f32.mrb[0].mxu0
    %v156 = vadd.f32 0.0, %v155
    %v157 = vpop.f32.mrb[0].mxu0
    %v158 = vpop.f32.mrb[0].mxu0
    %v159 = vadd.f32 0.0, %v158
    %v160 = vpop.f32.mrb[0].mxu0
    %161 = vdwg.mxu0
    %v162 = vadd.f32 %v47, %v156
    %v163 = vadd.f32 %v48, %v159
    %164 = vst [vmem:[#allocation2] sm:$0xff] %v162
    %165 = vst [vmem:[#allocation2 + $0x8] sm:$0xff] %v163
    // Predicated region
    $region22: #{tpu_custom_call.1} parent=1 // pred_check
      %p166 = pneg %p41
    $region23: #{tpu_custom_call.1} parent=1 // pred_check_branch
      %168 = sbr.rel (%p166) target = $region25
    $region24: #{tpu_custom_call.1} parent=1 // pred_region
      %v169 = vld [vmem:[#allocation2] sm:$0xff]
      %v170 = vld [vmem:[#allocation2 + $0x8] sm:$0xff]
      %v171 = vpack.c.bf16 %v170, %v169
      %v173 = vunpack.c.l.b16 %v171
      %v174 = vunpack.c.h.b16 %v171
      %v175 = vpack.c.b16 %v173, %v173
      %v176 = vpack.c.b16 %v174, %v174
      %179 = vst [vmem:[#allocation8] sm:$0xf] %v175
      %180 = vst [vmem:[#allocation8 + $0x4] sm:$0xf] %v176
    $region25: #{tpu_custom_call.1} parent=1 // pred_fallthru
      _
    // Predicated region
    $region26: #{tpu_custom_call.1} parent=1 // pred_check
      _
    $region27: #{tpu_custom_call.1} parent=1 // pred_check_branch
      %182 = sbr.rel (0) target = $region29
    $region28: #{tpu_custom_call.1} parent=1 // pred_region
      %s184 = ssub.s32 128, 128
      %185 = vsyncadd [#allocation5], %s184
      %s186 = sshll.u32 [#allocation8], 4
      %s187 = int_to_ptr.vmem [resolvable:$true] %s186
      %192 = dma.vmem_to_hbm [thread:$0]  %s187, 128, %s2, [#allocation5], 64, 64, 4
    $region29: #{tpu_custom_call.1} parent=1 // pred_fallthru
      _
    // Predicated region
    $region30: #{tpu_custom_call.1} parent=1 // pred_check
      _
    $region31: #{tpu_custom_call.1} parent=1 // pred_check_branch
      %194 = sbr.rel (0) target = $region33
    $region32: #{tpu_custom_call.1} parent=1 // pred_region
      %195 = dma.done [#allocation5], 128
    $region33: #{tpu_custom_call.1} parent=1 // pred_fallthru
      _
    %196 = vsyncpa [#allocation4], 1
    %197 = vsyncpa [#allocation7], 1
    %198 = vsyncpa [#allocation5], 1

</llo_original>
